<compile_context>
chip_gen: v6e
topology: v6e:2x2x1
jax: 0.10.0
libtpu: 0.0.40
codegen_flags: <defaults>
</compile_context>

<pallas_src>
import functools

import jax
import jax.numpy as jnp
from jax.experimental import pallas as pl
from jax.experimental.pallas import tpu as pltpu


# ----------------------------- model configuration ---------------------------------
ORDER = (2, 1, 1)          # (p, d, q)
SEASONAL_LAG = 4
SEASONAL_ORDER = (1, 1, 1) # (P, D, Q)
STATIC = 3
EXOG = 2
WINDOW = (-1, 1)           # (w0, w1)

F_IN = (ORDER[0] + ORDER[2] + SEASONAL_ORDER[0] + SEASONAL_ORDER[2]
        + STATIC + EXOG * (WINDOW[1] - WINDOW[0] + 1))

TILE_B = 1024              # lane tile for large batches (multiple of 128, tiny VMEM footprint)


def _round_up(x, m):
    return ((x + m - 1) // m) * m


# --------------------------------- Pallas kernel ------------------------------------
def _lr_kernel(t_pad, data_ref, w_ref, out_ref):
    """Single fused block, batch on lanes.

    data_ref : (rows, tile_b)  rows = [h0 (t_pad, edge-padded) | rest (R) | ones (1)]
    w_ref    : (rows, 1)       rows = [w_h0_eff (t_pad, zero-padded) | w_rest (R) | bias (1)]
    out_ref  : (1, tile_b)     y = ch0_contrib + max0 * (rest_contrib + bias)
    """
    data = data_ref[...]                                       # (rows, tile_b)
    w = w_ref[...]                                             # (rows, 1), lane-broadcast

    h0 = data[:t_pad, :]                                       # (t_pad, tile_b) channel-0 history
    max0 = jnp.max(h0, axis=0, keepdims=True)                  # (1, tile_b) == max_flow[:, 0]

    # channel-0 contribution: diff + /max0 ... *max0 round trip folded into w (host side),
    # so this is a plain weighted sublane reduction — no divide needed.
    ch0 = jnp.sum(h0 * w[:t_pad, :], axis=0, keepdims=True)    # (1, tile_b)
    # non-flow features + bias (via the constant "ones" row) are scaled by max0
    restc = jnp.sum(data[t_pad:, :] * w[t_pad:, :], axis=0, keepdims=True)

    out_ref[...] = ch0 + max0 * restc                          # lane-dense store


# --------------------------------- wrapper ------------------------------------------
def _diff_matrix(length, n):
    """Matrix M with M @ x == n-th order first-difference of x (length -> length-n)."""
    m = jnp.eye(length, dtype=jnp.float32)
    for _ in range(n):
        m = m[1:] - m[:-1]
    return m


def linear_regression_forward(history, horizon, weight, bias):
    B, T, C = history.shape
    p_, d_, q_ = ORDER
    P_, D_, Q_ = SEASONAL_ORDER
    lag = SEASONAL_LAG
    w0, w1 = WINDOW

    history = history.astype(jnp.float32)
    horizon = horizon.astype(jnp.float32)
    weight = weight.astype(jnp.float32)
    bias = bias.astype(jnp.float32)

    # ---- glue: feature slabs (pure slicing/concat, layout plumbing only) ----
    h0 = history[:, :, 0]                                               # (B, T)
    raw_q = history[:, -q_:, 1] if q_ > 0 else history[:, :0, 1]        # (B, q)
    raw_Q = (history[:, -Q_ * lag::lag, 1] if Q_ > 0
             else history[:, :0, 1])                                    # (B, Q)
    statics = history[:, -1, C - STATIC - EXOG: C - EXOG]               # (B, static)
    exog_h = history[:, w0 - 1:, C - EXOG:].reshape(B, -1)              # (B, exog*(1-w0))
    pieces = [raw_q, raw_Q, statics, exog_h]
    if w1 > 0:
        pieces.append(horizon[:, :w1, -EXOG:].reshape(B, -1))           # (B, exog*w1)
    rest = jnp.concatenate(pieces, axis=1)                              # (B, R)
    R = rest.shape[1]

    # ---- fc weight layout in the original f-concat order: [p | q | P | Q | static | exog]
    o = 0
    w_p = weight[0, o:o + p_]; o += p_
    w_q = weight[0, o:o + q_]; o += q_
    w_P = weight[0, o:o + P_]; o += P_
    w_Q = weight[0, o:o + Q_]; o += Q_
    w_s = weight[0, o:o + STATIC]; o += STATIC
    w_e = weight[0, o:]

    # ---- fold differencing into effective channel-0 weights over the full T history ----
    w_p_eff = _diff_matrix(p_ + d_, d_).T @ w_p                         # (p+d,)
    # torch.diff(P) is always a single first difference whenever D > 0
    w_P_eff = _diff_matrix(P_ + D_, 1 if D_ > 0 else 0).T @ w_P         # (P+D,)
    w_h0 = jnp.zeros((T,), jnp.float32)
    w_h0 = w_h0.at[T - (p_ + d_):].add(w_p_eff)                         # AR positions
    idx_P = T - (P_ + D_) * lag + lag * jnp.arange(P_ + D_)             # seasonal positions
    w_h0 = w_h0.at[idx_P].add(w_P_eff)

    # ---- sublane-align the h0|rest split: pad h0 rows to a multiple of 8 ----
    T_pad = _round_up(T, 8)
    h0 = jnp.pad(h0, ((0, 0), (0, T_pad - T)), mode="edge")             # edge-pad keeps max intact
    w_h0 = jnp.pad(w_h0, (0, T_pad - T))                                # zero weight on pad rows

    w_rest = jnp.concatenate([w_q, w_Q, w_s, w_e], axis=0)              # matches `rest`
    w_slab = jnp.concatenate([w_h0, w_rest, bias.reshape(1)])[:, None]  # (rows, 1)

    # ---- fused data slab, batch on the lane axis, padded to a 128-lane multiple ----
    ones = jnp.ones((B, 1), jnp.float32)
    data = jnp.concatenate([h0, rest, ones], axis=1).T                  # (rows, B)
    rows = T_pad + R + 1

    tile_b = min(_round_up(B, 128), TILE_B)                             # lane tile, mult of 128
    B_pad = _round_up(B, tile_b)
    if B_pad != B:
        data = jnp.pad(data, ((0, 0), (0, B_pad - B)))                  # zero lanes, sliced off below
    grid = (B_pad // tile_b,)

    out = pl.pallas_call(
        functools.partial(_lr_kernel, T_pad),
        out_shape=jax.ShapeDtypeStruct((1, B_pad), jnp.float32),
        grid=grid,
        in_specs=[pl.BlockSpec((rows, tile_b), lambda i: (0, i)),
                  pl.BlockSpec((rows, 1), lambda i: (0, 0))],
        out_specs=pl.BlockSpec((1, tile_b), lambda i: (0, i)),
        compiler_params=pltpu.CompilerParams(
            dimension_semantics=("parallel",)),
    )(data, w_slab)

    return out[0, :B]                                                   # .squeeze() -> (B,)


# TODO(synk): forecast() (autoregressive roll loop) is not ported; only forward() is implemented.


# --------------------------------- reference ----------------------------------------
def reference_forward(history, horizon, weight, bias):
    """Pure-JAX transcription of the PyTorch forward, for validation."""
    B, T, C = history.shape
    p_, d_, q_ = ORDER
    P_, D_, Q_ = SEASONAL_ORDER
    lag = SEASONAL_LAG
    w0, w1 = WINDOW

    max_flow = jnp.max(history, axis=1)
    max_flow = max_flow.at[:, 1:].set(1.0)
    hist = history / max_flow[:, None, :]

    p = hist[:, -(p_ + d_):, 0]
    for _ in range(d_):
        p = jnp.diff(p, axis=1)
    q = hist[:, -q_:, 1] if q_ > 0 else hist[:, :0, 1]
    P = hist[:, -(P_ + D_) * lag::lag, 0]
    if D_ > 0:
        P = jnp.diff(P, axis=1)
    Q = hist[:, -Q_ * lag::lag, 1] if Q_ > 0 else hist[:, :0, 1]
    f = [p, q, P, Q,
         hist[:, -1, -STATIC - EXOG:-EXOG],
         hist[:, w0 - 1:, -EXOG:].reshape(B, -1)]
    if w1 > 0:
        f.append(horizon[:, :w1, -EXOG:].reshape(B, -1))
    f = jnp.concatenate(f, axis=1)
    x = f @ weight[0] + bias[0]
    return x * max_flow[:, 0]


# --------------------------------- main ---------------------------------------------
if __name__ == "__main__":
    B, T, H = 4, 24, 4
    C = 2 + STATIC + EXOG                      # flow, q-channel, static..., exogenous...

    key = jax.random.PRNGKey(0)
    k1, k2, k3, k4, k5, k6 = jax.random.split(key, 6)
    history = jax.random.uniform(k1, (B, T, C), jnp.float32, minval=0.1, maxval=2.0)
    horizon = jax.random.uniform(k2, (B, H, C), jnp.float32, minval=0.1, maxval=2.0)

    bound = 1.0 / jnp.sqrt(jnp.float32(F_IN))  # nn.Linear default init range
    weight = jax.random.uniform(k3, (1, F_IN), jnp.float32, minval=-bound, maxval=bound)
    bias = jax.random.uniform(k4, (1,), jnp.float32, minval=-bound, maxval=bound)

    # small batch (single 128-lane block, lane-padded)
    y = jax.block_until_ready(linear_regression_forward(history, horizon, weight, bias))
    y_ref = reference_forward(history, horizon, weight, bias)
    assert y.shape == (B,)
    assert jnp.allclose(y, y_ref, rtol=1e-4, atol=1e-4), (y, y_ref)

    # larger, ragged batch (exercises the tiled "parallel" grid + lane-padding path)
    B2 = TILE_B + 200
    history2 = jax.random.uniform(k5, (B2, T, C), jnp.float32, minval=0.1, maxval=2.0)
    horizon2 = jax.random.uniform(k6, (B2, H, C), jnp.float32, minval=0.1, maxval=2.0)
    y2 = jax.block_until_ready(linear_regression_forward(history2, horizon2, weight, bias))
    y2_ref = reference_forward(history2, horizon2, weight, bias)
    assert y2.shape == (B2,)
    assert jnp.allclose(y2, y2_ref, rtol=1e-4, atol=1e-4), (y2, y2_ref)

    print("KERNEL_OK")
</pallas_src>

<mosaic_0001>
module attributes {stable_mosaic.version = 11 : i64} {
  func.func @_lr_kernel(%arg0: i32, %arg1: memref<36x128xf32, #tpu.memory_space<vmem>>, %arg2: memref<36x1xf32, #tpu.memory_space<vmem>>, %arg3: memref<1x128xf32, #tpu.memory_space<vmem>>) attributes {dimension_semantics = [#tpu.dimension_semantics<parallel>], iteration_bounds = array<i64: 1>, scalar_prefetch = 0 : i64, scratch_operands = 0 : i64, tpu.core_type = #tpu.core_type<tc>, window_params = [{transform_indices = @transform_0, window_bounds = array<i64: 36, 128>}, {pipeline_mode = #tpu.pipeline_mode<synchronous>, transform_indices = @transform_1, window_bounds = array<i64: 36, 1>}, {transform_indices = @transform_2, window_bounds = array<i64: 1, 128>}]} {
    %c0 = arith.constant 0 : index
    %c0_0 = arith.constant 0 : index
    %0 = vector.load %arg1[%c0, %c0_0] : memref<36x128xf32, #tpu.memory_space<vmem>>, vector<36x128xf32>
    %c0_1 = arith.constant 0 : index
    %c0_2 = arith.constant 0 : index
    %1 = vector.load %arg2[%c0_1, %c0_2] : memref<36x1xf32, #tpu.memory_space<vmem>>, vector<36x1xf32>
    %2 = vector.extract_strided_slice %0 {offsets = [0, 0], sizes = [24, 128], strides = [1, 1]} : vector<36x128xf32> to vector<24x128xf32>
    %cst = arith.constant dense<0xFF800000> : vector<128xf32>
    %3 = vector.multi_reduction <maximumf>, %2, %cst [0] : vector<24x128xf32> to vector<128xf32>
    %4 = vector.shape_cast %3 : vector<128xf32> to vector<1x128xf32>
    %5 = vector.extract_strided_slice %1 {offsets = [0, 0], sizes = [24, 1], strides = [1, 1]} : vector<36x1xf32> to vector<24x1xf32>
    %6 = vector.broadcast %5 : vector<24x1xf32> to vector<24x128xf32>
    %7 = arith.mulf %2, %6 : vector<24x128xf32>
    %cst_3 = arith.constant dense<0.000000e+00> : vector<128xf32>
    %8 = vector.multi_reduction <add>, %7, %cst_3 [0] : vector<24x128xf32> to vector<128xf32>
    %9 = vector.shape_cast %8 : vector<128xf32> to vector<1x128xf32>
    %10 = vector.extract_strided_slice %0 {offsets = [24, 0], sizes = [12, 128], strides = [1, 1]} : vector<36x128xf32> to vector<12x128xf32>
    %11 = vector.extract_strided_slice %1 {offsets = [24, 0], sizes = [12, 1], strides = [1, 1]} : vector<36x1xf32> to vector<12x1xf32>
    %12 = vector.broadcast %11 : vector<12x1xf32> to vector<12x128xf32>
    %13 = arith.mulf %10, %12 : vector<12x128xf32>
    %cst_4 = arith.constant dense<0.000000e+00> : vector<128xf32>
    %14 = vector.multi_reduction <add>, %13, %cst_4 [0] : vector<12x128xf32> to vector<128xf32>
    %15 = vector.shape_cast %14 : vector<128xf32> to vector<1x128xf32>
    %16 = arith.mulf %4, %15 : vector<1x128xf32>
    %17 = arith.addf %9, %16 : vector<1x128xf32>
    %c0_5 = arith.constant 0 : index
    %c0_6 = arith.constant 0 : index
    %18 = vector.load %arg3[%c0_5, %c0_6] : memref<1x128xf32, #tpu.memory_space<vmem>>, vector<1x128xf32>
    tpu.vector_store %arg3[%c0_5, %c0_6], %17 {strides = array<i32>} : memref<1x128xf32, #tpu.memory_space<vmem>>, vector<1x128xf32>,
    return
  }
  func.func @transform_0(%arg0: i32) -> (i32, i32) {
    %c0_i32 = arith.constant 0 : i32
    %c0_i32_0 = arith.constant 0 : i32
    return %c0_i32, %arg0 : i32, i32
  }
  func.func @transform_1(%arg0: i32) -> (i32, i32) {
    %c0_i32 = arith.constant 0 : i32
    %c0_i32_0 = arith.constant 0 : i32
    %c0_i32_1 = arith.constant 0 : i32
    return %c0_i32, %c0_i32_0 : i32, i32
  }
  func.func @transform_2(%arg0: i32) -> (i32, i32) {
    %c0_i32 = arith.constant 0 : i32
    %c0_i32_0 = arith.constant 0 : i32
    return %c0_i32, %arg0 : i32, i32
  }
}

</mosaic_0001>

<llo_original>
// kernel: tpu_custom_call.1
$region0: #{tpu_custom_call.1}
  #allocation0 [shape = 'u32[]', space=smem, size = 0x4, offset = 0x4, fixed_abs, tag = 'smem constant byte address 0x4 - core index']
  #allocation1 [shape = 'u32[144,128]{1,0:T(1,128)}', space=vmem, size = 0x12000, scoped, tag = 'internal scratch']
  %s0 = inlined_call_operand.vmem [shape: f32[36,128], index: 0, kind: input, shape index: {}]
  %s1 = inlined_call_operand.vmem [shape: f32[36,1], index: 1, kind: input, shape index: {}]
  %s2 = inlined_call_operand.hbm [shape: f32[1,128], index: 2, kind: output, shape index: {}]
  %s3 = sld [smem:[#allocation0]]
  $region18: #{tpu_custom_call.1} parent=0
    _
  %s5 = ssub.s32 1, %s3
  %s6 = scalar_select 0, %s5, %s3
  $region1: #{tpu_custom_call.1} parent=0
    #allocation2 [shape = 'u8[512]{0}', space=vmem, size = 0x400, scoped, tag = 'output window, operand 0, single buffered']
    #allocation3 [shape = 's32[1]{0}', space=sflag, size = 0x4, scoped, tag = 'scoped memory for tpu_custom_call.1']
    %7 = vsyncpa [#allocation3], 0
    // Predicated region
    $region2: #{tpu_custom_call.1} parent=1 // pred_check
      _
    $region3: #{tpu_custom_call.1} parent=1 // pred_check_branch
      %9 = sbr.rel (0) target = $region5
    $region4: #{tpu_custom_call.1} parent=1 // pred_region
      _
    $region5: #{tpu_custom_call.1} parent=1 // pred_fallthru
      _
    // Predicated region
    $region6: #{tpu_custom_call.1} parent=1 // pred_check
      _
    $region7: #{tpu_custom_call.1} parent=1 // pred_check_branch
      %11 = sbr.rel (0) target = $region9
    $region8: #{tpu_custom_call.1} parent=1 // pred_region
      _
    $region9: #{tpu_custom_call.1} parent=1 // pred_fallthru
      _
    %v12 = vld [vmem:[%s0] sm:$0xff]
    %v13 = vld [vmem:[%s0 + $0x8] sm:$0xff]
    %v14 = vld [vmem:[%s0 + $0x10] sm:$0xff]
    %v15 = vld [vmem:[%s0 + $0x18] sm:$0xff]
    %v16 = vld [vmem:[%s0 + $0x20] sm:$0xf]
    %v17 = vld [vmem:[%s1] sm:$0xff]
    %v18 = vld [vmem:[%s1 + $0x8] sm:$0xff]
    %v19 = vld [vmem:[%s1 + $0x10] sm:$0xff]
    %v20 = vld [vmem:[%s1 + $0x18] sm:$0xff]
    %v21 = vld [vmem:[%s1 + $0x20] sm:$0xf]
    %v22 = vmax.f32 %v12, %v13
    %v23 = vmax.f32 %v22, %v14
    %v24 = vrot.slane %v23, 4
    %v25 = vmax.f32 %v23, %v24
    %v26 = vrot.slane %v25, 2
    %v27 = vmax.f32 %v25, %v26
    %v28 = vrot.slane %v27, 1
    %v29 = vmax.f32 %v27, %v28
    %31 = vset.pattern.permute.xlu0 0
    %32 = vperm.xlu0 %31, %v17
    %v33 = vpop.permute.xlu0 %32
    %36 = vset.pattern.permute.xlu0 0
    %37 = vperm.xlu0 %36, %v18
    %v38 = vpop.permute.xlu0 %37
    %41 = vset.pattern.permute.xlu0 0
    %42 = vperm.xlu0 %41, %v19
    %v43 = vpop.permute.xlu0 %42
    %v45 = vmul.f32 %v12, %v33
    %v46 = vmul.f32 %v13, %v38
    %v47 = vmul.f32 %v14, %v43
    %v48 = vadd.f32 %v45, %v46
    %v49 = vadd.f32 %v48, %v47
    %v50 = vrot.slane %v49, 4
    %v51 = vadd.f32 %v49, %v50
    %v52 = vrot.slane %v51, 2
    %v53 = vadd.f32 %v51, %v52
    %v54 = vrot.slane %v53, 1
    %v55 = vadd.f32 %v53, %v54
    %57 = vset.pattern.permute.xlu0 0
    %58 = vperm.xlu0 %57, %v20
    %v59 = vpop.permute.xlu0 %58
    %62 = vset.pattern.permute.xlu0 0
    %63 = vperm.xlu0 %62, %v21
    %v64 = vpop.permute.xlu0 %63
    %v66 = vmul.f32 %v15, %v59
    %v67 = vmul.f32 %v16, %v64
    %vm68 = vcmask 1043456
    %v69 = vsel %vm68, %v67, 0.0
    %v70 = vadd.f32 %v66, %v69
    %v71 = vrot.slane %v70, 4
    %v72 = vadd.f32 %v70, %v71
    %v73 = vrot.slane %v72, 2
    %v74 = vadd.f32 %v72, %v73
    %v75 = vrot.slane %v74, 1
    %v76 = vadd.f32 %v74, %v75
    %v77 = vmul.f32 %v29, %v76
    %v78 = vadd.f32 %v55, %v77
    %79 = vst [vmem:[#allocation2] sm:$0x1] %v78
    // Predicated region
    $region10: #{tpu_custom_call.1} parent=1 // pred_check
      _
    $region11: #{tpu_custom_call.1} parent=1 // pred_check_branch
      %81 = sbr.rel (0) target = $region13
    $region12: #{tpu_custom_call.1} parent=1 // pred_region
      %s83 = ssub.s32 16, 16
      %84 = vsyncadd [#allocation3], %s83
      %s86 = sshll.u32 [#allocation2], 4
      %s87 = int_to_ptr.vmem [resolvable:$true] %s86
      %89 = dma.vmem_to_hbm [thread:$0]  %s87, 16, %s2, [#allocation3]
    $region13: #{tpu_custom_call.1} parent=1 // pred_fallthru
      _
    // Predicated region
    $region14: #{tpu_custom_call.1} parent=1 // pred_check
      _
    $region15: #{tpu_custom_call.1} parent=1 // pred_check_branch
      %91 = sbr.rel (0) target = $region17
    $region16: #{tpu_custom_call.1} parent=1 // pred_region
      %92 = dma.done [#allocation3], 16
    $region17: #{tpu_custom_call.1} parent=1 // pred_fallthru
      _
    %93 = vsyncpa [#allocation3], 1

</llo_original>
